<compile_context>
chip_gen: v6e
topology: v6e:2x2x1
jax: 0.10.0
libtpu: 0.0.40
codegen_flags: <defaults>
</compile_context>

<pallas_src>
import functools

import jax
import jax.numpy as jnp
from jax.experimental import pallas as pl
from jax.experimental.pallas import tpu as pltpu


_LANE = 128
# Per-grid-step HBM traffic target (A tile + B tile + prob tile + dec tile).
_TARGET_STEP_BYTES = 8 * 1024 * 1024
# Hard ceiling on the double-buffered VMEM working set (v7x: 64 MiB/TC).
_VMEM_HARD_CAP = 40 * 1024 * 1024


def _round_up(x, m):
    return (x + m - 1) // m * m


def _bytes_per_lane(k, in_itemsize, out_itemsize):
    # A + B inputs and prob output are K deep; decode output is 1 deep (f32).
    return k * (2 * in_itemsize + out_itemsize) + 4


def _choose_tile(hw, k, in_itemsize, out_itemsize):
    """Pick (T, hw_pad): spatial tile (multiple of 128) and padded HW.

    T is sized so one grid step moves ~_TARGET_STEP_BYTES and the
    double-buffered working set stays under _VMEM_HARD_CAP.
    """
    bpl = _bytes_per_lane(k, in_itemsize, out_itemsize)
    t_cap = max(_LANE, (_TARGET_STEP_BYTES // bpl) // _LANE * _LANE)
    t_vmem = max(_LANE, (_VMEM_HARD_CAP // (2 * bpl)) // _LANE * _LANE)
    t_cap = min(t_cap, t_vmem)

    hw128 = _round_up(hw, _LANE)
    if hw128 <= t_cap:
        # One tile covers the whole (128-padded) spatial extent.
        return hw128, hw128

    if hw % _LANE == 0:
        # Prefer a divisor of HW (zero-pad, zero-copy path) unless the best
        # divisor is so small that per-step overhead would dominate.
        t = t_cap
        while t >= _LANE:
            if hw % t == 0:
                break
            t -= _LANE
        if t >= max(512, t_cap // 4):
            return t, hw

    # Pad HW up to a multiple of the target tile: one bounded copy of x, but
    # keeps tiles large and per-step VMEM bounded on every generation.
    return t_cap, _round_up(hw, t_cap)


def _ordreg_kernel(a_ref, b_ref, prob_ref, dec_ref):
    # a_ref / b_ref: (1, K, T) logit tiles for the even / odd channels.
    a = a_ref[...]
    b = b_ref[...]
    if a.dtype != jnp.float32:  # keep the math in f32 (v5e VPU/EUP lack bf16)
        a = a.astype(jnp.float32)
        b = b.astype(jnp.float32)
    d = b - a  # single VPU pass, reused for both outputs
    # P(class 1) of the 2-way softmax over (a, b) == sigmoid(b - a)   (EUP).
    prob_ref[...] = jax.nn.sigmoid(d).astype(prob_ref.dtype)
    # decode label = #bins with prob >= 0.5  <=>  #bins with d >= 0
    # (sigmoid is monotone, sigmoid(0) == 0.5).  XLU sublane reduction.
    dec_ref[...] = jnp.sum((d >= 0.0).astype(jnp.float32), axis=1, keepdims=True)


@jax.jit
def ordinal_regression_layer(x):
    """x: (N, C, H, W) logits, C even (C = 2K).  Returns (decode_c, ord_c1)."""
    N, C, H, W = x.shape
    assert C % 2 == 0, "channel count must be even (C = 2K)"
    K = C // 2
    HW = H * W

    in_item = jnp.dtype(x.dtype).itemsize
    # Emit prob in the input precision when it is bf16: prob is the largest
    # output stream, halving it cuts total HBM bytes ~25-33% on this
    # mem-bound op.  (PyTorch module always returns f32; f32 inputs still do.)
    prob_dtype = x.dtype if x.dtype in (jnp.bfloat16, jnp.float32) else jnp.float32
    out_item = jnp.dtype(prob_dtype).itemsize

    T, HW_pad = _choose_tile(HW, K, in_item, out_item)
    n_t = HW_pad // T

    # Lane-pack: bin k's even channel in lanes [0, HW_pad), odd channel in
    # [HW_pad, 2*HW_pad) of one array; two BlockSpecs over the SAME array read
    # the A / B tiles directly from HBM.
    if HW_pad == HW:
        x2 = x.reshape(N, K, 2 * HW)  # free reshape for contiguous NCHW
    else:
        x2 = jnp.pad(
            x.reshape(N, K, 2, HW),
            ((0, 0), (0, 0), (0, 0), (0, HW_pad - HW)),
        ).reshape(N, K, 2 * HW_pad)

    grid = (N, n_t)
    a_spec = pl.BlockSpec((1, K, T), lambda n, t: (n, 0, t))
    b_spec = pl.BlockSpec((1, K, T), lambda n, t: (n, 0, t + n_t))

    # Explicit VMEM budget: A, B, prob double-buffered (+ tiny dec), ~30%
    # headroom.  Set explicitly so tile choice is portable across v5e (16 MiB
    # scoped default), v6e/v7x (32 MiB default).
    step_bytes = T * _bytes_per_lane(K, in_item, out_item)
    vmem_limit = min(int(2 * step_bytes * 1.3) + (1 << 20), 64 * 1024 * 1024)

    cost = pl.CostEstimate(
        flops=3 * N * K * HW_pad,
        transcendentals=N * K * HW_pad,
        bytes_accessed=N * HW_pad * _bytes_per_lane(K, in_item, out_item),
    )

    prob, dec = pl.pallas_call(
        _ordreg_kernel,
        out_shape=(
            jax.ShapeDtypeStruct((N, K, HW_pad), prob_dtype),
            jax.ShapeDtypeStruct((N, 1, HW_pad), jnp.float32),
        ),
        grid_spec=pltpu.PrefetchScalarGridSpec(
            num_scalar_prefetch=0,
            grid=grid,
            in_specs=[a_spec, b_spec],
            out_specs=[
                pl.BlockSpec((1, K, T), lambda n, t: (n, 0, t)),
                pl.BlockSpec((1, 1, T), lambda n, t: (n, 0, t)),
            ],
        ),
        compiler_params=pltpu.CompilerParams(
            dimension_semantics=("parallel", "parallel"),
            vmem_limit_bytes=vmem_limit,
        ),
        cost_estimate=cost,
    )(x2, x2)

    if HW_pad != HW:
        prob = prob[:, :, :HW]
        dec = dec[:, :, :HW]

    ord_c1 = prob.reshape(N, K, H, W).astype(jnp.float32) \
        if prob_dtype != jnp.float32 else prob.reshape(N, K, H, W)
    decode_c = dec.reshape(N, 1, H, W)
    return decode_c, ord_c1


def _reference(x):
    """Pure-JAX reference matching the PyTorch forward."""
    N, C, H, W = x.shape
    K = C // 2
    A = x[:, ::2, :, :].reshape(N, 1, K * H * W)
    B = x[:, 1::2, :, :].reshape(N, 1, K * H * W)
    cat = jnp.concatenate((A, B), axis=1)
    ord_c = jax.nn.softmax(cat, axis=1)
    ord_c1 = ord_c[:, 1, :].reshape(N, K, H, W)
    decode_c = jnp.sum((ord_c1 >= 0.5).astype(jnp.float32), axis=1).reshape(N, 1, H, W)
    return decode_c, ord_c1


if __name__ == "__main__":
    key = jax.random.PRNGKey(0)

    # Small shape consistent with the module: N=2, C=8 (K=4), H=W=16 (HW=256).
    x = jax.random.normal(key, (2, 8, 16, 16), dtype=jnp.float32)
    decode_c, ord_c1 = jax.block_until_ready(ordinal_regression_layer(x))

    ref_dec, ref_ord = _reference(x)
    assert decode_c.shape == (2, 1, 16, 16)
    assert ord_c1.shape == (2, 4, 16, 16)
    assert jnp.allclose(ord_c1, ref_ord, atol=1e-5, rtol=1e-5)
    assert jnp.allclose(decode_c, ref_dec, atol=1e-6)

    # Also exercise the padded path (HW=100, not a multiple of 128).
    x_pad = jax.random.normal(jax.random.PRNGKey(1), (1, 6, 10, 10), dtype=jnp.float32)
    dec_p, ord_p = jax.block_until_ready(ordinal_regression_layer(x_pad))
    ref_dec_p, ref_ord_p = _reference(x_pad)
    assert jnp.allclose(ord_p, ref_ord_p, atol=1e-5, rtol=1e-5)
    assert jnp.allclose(dec_p, ref_dec_p, atol=1e-6)

    print("KERNEL_OK")
</pallas_src>

<mosaic_0001>
module attributes {stable_mosaic.version = 11 : i64} {
  func.func @_ordreg_kernel(%arg0: i32, %arg1: i32, %arg2: memref<1x4x256xf32, #tpu.memory_space<vmem>>, %arg3: memref<1x4x256xf32, #tpu.memory_space<vmem>>, %arg4: memref<1x4x256xf32, #tpu.memory_space<vmem>>, %arg5: memref<1x1x256xf32, #tpu.memory_space<vmem>>) attributes {dimension_semantics = [#tpu.dimension_semantics<parallel>, #tpu.dimension_semantics<parallel>], iteration_bounds = array<i64: 2, 1>, scalar_prefetch = 0 : i64, scratch_operands = 0 : i64, tpu.core_type = #tpu.core_type<tc>, window_params = [{transform_indices = @transform_0, window_bounds = array<i64: 1, 4, 256>}, {transform_indices = @transform_1, window_bounds = array<i64: 1, 4, 256>}, {transform_indices = @transform_2, window_bounds = array<i64: 1, 4, 256>}, {transform_indices = @transform_3, window_bounds = array<i64: 1, 1, 256>}]} {
    %c0 = arith.constant 0 : index
    %c0_0 = arith.constant 0 : index
    %c0_1 = arith.constant 0 : index
    %0 = vector.load %arg2[%c0, %c0_0, %c0_1] : memref<1x4x256xf32, #tpu.memory_space<vmem>>, vector<1x4x256xf32>
    %c0_2 = arith.constant 0 : index
    %c0_3 = arith.constant 0 : index
    %c0_4 = arith.constant 0 : index
    %1 = vector.load %arg3[%c0_2, %c0_3, %c0_4] : memref<1x4x256xf32, #tpu.memory_space<vmem>>, vector<1x4x256xf32>
    %2 = arith.subf %1, %0 : vector<1x4x256xf32>
    %3 = arith.negf %2 : vector<1x4x256xf32>
    %4 = math.exp %3 : vector<1x4x256xf32>
    %cst = arith.constant 1.000000e+00 : f32
    %5 = vector.broadcast %cst : f32 to vector<1x4x256xf32>
    %6 = arith.addf %5, %4 : vector<1x4x256xf32>
    %7 = arith.divf %5, %6 : vector<1x4x256xf32>
    %c0_5 = arith.constant 0 : index
    %c0_6 = arith.constant 0 : index
    %c0_7 = arith.constant 0 : index
    %8 = vector.load %arg4[%c0_5, %c0_6, %c0_7] : memref<1x4x256xf32, #tpu.memory_space<vmem>>, vector<1x4x256xf32>
    tpu.vector_store %arg4[%c0_5, %c0_6, %c0_7], %7 {strides = array<i32>} : memref<1x4x256xf32, #tpu.memory_space<vmem>>, vector<1x4x256xf32>,
    %cst_8 = arith.constant 0.000000e+00 : f32
    %9 = vector.broadcast %cst_8 : f32 to vector<1x4x256xf32>
    %10 = arith.cmpf oge, %2, %9 : vector<1x4x256xf32>
    %11 = arith.extui %10 : vector<1x4x256xi1> to vector<1x4x256xi32>
    %12 = arith.sitofp %11 : vector<1x4x256xi32> to vector<1x4x256xf32>
    %cst_9 = arith.constant dense<0.000000e+00> : vector<1x256xf32>
    %13 = vector.multi_reduction <add>, %12, %cst_9 [1] : vector<1x4x256xf32> to vector<1x256xf32>
    %14 = vector.shape_cast %13 : vector<1x256xf32> to vector<1x1x256xf32>
    %c0_10 = arith.constant 0 : index
    %c0_11 = arith.constant 0 : index
    %c0_12 = arith.constant 0 : index
    %15 = vector.load %arg5[%c0_10, %c0_11, %c0_12] : memref<1x1x256xf32, #tpu.memory_space<vmem>>, vector<1x1x256xf32>
    tpu.vector_store %arg5[%c0_10, %c0_11, %c0_12], %14 {strides = array<i32>} : memref<1x1x256xf32, #tpu.memory_space<vmem>>, vector<1x1x256xf32>,
    return
  }
  func.func @transform_0(%arg0: i32, %arg1: i32) -> (i32, i32, i32) {
    %c0_i32 = arith.constant 0 : i32
    %c0_i32_0 = arith.constant 0 : i32
    return %arg0, %c0_i32, %arg1 : i32, i32, i32
  }
  func.func @transform_1(%arg0: i32, %arg1: i32) -> (i32, i32, i32) {
    %c1_i32 = arith.constant 1 : i32
    %0 = arith.addi %arg1, %c1_i32 : i32
    %c0_i32 = arith.constant 0 : i32
    %c0_i32_0 = arith.constant 0 : i32
    return %arg0, %c0_i32, %0 : i32, i32, i32
  }
  func.func @transform_2(%arg0: i32, %arg1: i32) -> (i32, i32, i32) {
    %c0_i32 = arith.constant 0 : i32
    %c0_i32_0 = arith.constant 0 : i32
    return %arg0, %c0_i32, %arg1 : i32, i32, i32
  }
  func.func @transform_3(%arg0: i32, %arg1: i32) -> (i32, i32, i32) {
    %c0_i32 = arith.constant 0 : i32
    %c0_i32_0 = arith.constant 0 : i32
    return %arg0, %c0_i32, %arg1 : i32, i32, i32
  }
}

</mosaic_0001>

<llo_original>
// kernel: ordinal_regression_layer.1
$region0: #{ordinal_regression_layer.1}
  #allocation0 [shape = 'u32[]', space=smem, size = 0x4, offset = 0x4, fixed_abs, tag = 'smem constant byte address 0x4 - core index']
  #allocation1 [shape = 'u32[144,128]{1,0:T(1,128)}', space=vmem, size = 0x12000, scoped, tag = 'internal scratch']
  %s0 = inlined_call_operand.vmem [shape: f32[2,4,512], index: 0, kind: input, shape index: {}, may-alias: {0,1}]
  %s1 = inlined_call_operand.vmem [shape: f32[2,4,512], index: 1, kind: input, shape index: {}, may-alias: {0,1}]
  %s2 = inlined_call_operand.vmem [shape: f32[2,4,256], index: 2, kind: output, shape index: {0}]
  %s3 = inlined_call_operand.vmem [shape: f32[2,1,256], index: 3, kind: output, shape index: {1}]
  %4 = xla_tuple %s2, %s3
  %s5 = sld [smem:[#allocation0]]
  $region49: #{ordinal_regression_layer.1} parent=0
    _
  %s7 = ssub.s32 1, %s5
  %s8 = scalar_select 0, %s7, %s5
  loop: start=0, step=1, limit=4
  $region2: #{ordinal_regression_layer.1} parent=0 // loop_pre_header
    _
  $region3: #{ordinal_regression_layer.1} parent=0 // loop_header
    %s10 = sphi 0, %s14
    %p11 = scmp.ge.s32.totalorder %s10, 4
    %s17 = sphi 0, %s29
    %s18 = sphi 0, %s25
    %s19 = sphi 0, %s17
    %s20 = sphi 0, %s18
    %s21 = sphi 0, %s19
    %s22 = sphi 0, %s20
    %s34 = sphi 0, %s36
    %s37 = sphi 0, %s34
    %s38 = sphi 0, %s37
    %s54 = sphi 0, %s38
    %s64 = sphi 0, %s66
    %s67 = sphi 0, %s64
    %s68 = sphi 0, %s67
    %s84 = sphi 0, %s68
    %s92 = sphi 0, %s94
    %s95 = sphi 0, %s92
    %s96 = sphi 0, %s95
    %s112 = sphi 0, %s96
    %s120 = sphi 0, %s122
    %s123 = sphi 0, %s120
    %s124 = sphi 0, %s123
    %s140 = sphi 0, %s124
  $region4: #{ordinal_regression_layer.1} parent=0 // loop_header_branch
    %13 = sbr.rel (%p11) target = $region8
  $region5: #{ordinal_regression_layer.1} parent=0 // loop_body
    %s15 = ssub.s32 %s10, 1
    %s16 = ssub.s32 %s10, 2
    %s23 = sadd.s32 1, %s18
    %p24 = scmp.ge.s32.totalorder %s23, 1
    %s25 = scalar_select %p24, 0, %s23
    %s26 = sadd.s32 1, %s17
    %s27 = scalar_select %p24, %s26, %s17
    %p28 = scmp.ge.s32.totalorder %s27, 2
    %s29 = scalar_select %p28, 0, %s27
    %s30 = ssub.s32 %s17, %s29
    %s31 = ssub.s32 %s18, %s25
    %s32 = sor.u32 %s30, %s31
    %p33 = scmp.eq.s32.totalorder %s32, 0
    %s35 = sadd.s32 %s34, 1
    %s36 = scalar_select %p33, %s34, %s35
    %p39 = pneg %p33
    %p40 = scmp.eq.s32.totalorder %s10, 1
    %p41 = por %p39, %p40
    %p42 = scmp.ne.s32.totalorder %s34, %s37
    %p43 = scmp.eq.s32.totalorder %s10, 0
    %p44 = por %p42, %p43
    %p45 = scmp.ne.s32.totalorder %s34, %s37
    %p46 = scmp.eq.s32.totalorder %s15, 1
    %p47 = por %p45, %p46
    %p48 = scmp.ne.s32.totalorder %s37, %s38
    %p49 = scmp.eq.s32.totalorder %s15, 0
    %p50 = por %p48, %p49
    %p51 = scmp.ne.s32.totalorder %s37, %s38
    %p52 = scmp.eq.s32.totalorder %s16, 1
    %p53 = por %p51, %p52
    %p55 = scmp.ne.s32.totalorder %s38, %s54
    %p56 = scmp.eq.s32.totalorder %s16, 0
    %p57 = por %p55, %p56
    %s58 = sadd.s32 %s18, 1
    %s59 = sadd.s32 %s25, 1
    %s60 = ssub.s32 %s17, %s29
    %s61 = ssub.s32 %s58, %s59
    %s62 = sor.u32 %s60, %s61
    %p63 = scmp.eq.s32.totalorder %s62, 0
    %s65 = sadd.s32 %s64, 1
    %s66 = scalar_select %p63, %s64, %s65
    %p69 = pneg %p63
    %p70 = scmp.eq.s32.totalorder %s10, 1
    %p71 = por %p69, %p70
    %p72 = scmp.ne.s32.totalorder %s64, %s67
    %p73 = scmp.eq.s32.totalorder %s10, 0
    %p74 = por %p72, %p73
    %p75 = scmp.ne.s32.totalorder %s64, %s67
    %p76 = scmp.eq.s32.totalorder %s15, 1
    %p77 = por %p75, %p76
    %p78 = scmp.ne.s32.totalorder %s67, %s68
    %p79 = scmp.eq.s32.totalorder %s15, 0
    %p80 = por %p78, %p79
    %p81 = scmp.ne.s32.totalorder %s67, %s68
    %p82 = scmp.eq.s32.totalorder %s16, 1
    %p83 = por %p81, %p82
    %p85 = scmp.ne.s32.totalorder %s68, %s84
    %p86 = scmp.eq.s32.totalorder %s16, 0
    %p87 = por %p85, %p86
    %s88 = ssub.s32 %s17, %s29
    %s89 = ssub.s32 %s18, %s25
    %s90 = sor.u32 %s88, %s89
    %p91 = scmp.eq.s32.totalorder %s90, 0
    %s93 = sadd.s32 %s92, 1
    %s94 = scalar_select %p91, %s92, %s93
    %p97 = pneg %p91
    %p98 = scmp.eq.s32.totalorder %s10, 1
    %p99 = por %p97, %p98
    %p100 = scmp.ne.s32.totalorder %s92, %s95
    %p101 = scmp.eq.s32.totalorder %s10, 0
    %p102 = por %p100, %p101
    %p103 = scmp.ne.s32.totalorder %s92, %s95
    %p104 = scmp.eq.s32.totalorder %s15, 1
    %p105 = por %p103, %p104
    %p106 = scmp.ne.s32.totalorder %s95, %s96
    %p107 = scmp.eq.s32.totalorder %s15, 0
    %p108 = por %p106, %p107
    %p109 = scmp.ne.s32.totalorder %s95, %s96
    %p110 = scmp.eq.s32.totalorder %s16, 1
    %p111 = por %p109, %p110
    %p113 = scmp.ne.s32.totalorder %s96, %s112
    %p114 = scmp.eq.s32.totalorder %s16, 0
    %p115 = por %p113, %p114
    %s116 = ssub.s32 %s17, %s29
    %s117 = ssub.s32 %s18, %s25
    %s118 = sor.u32 %s116, %s117
    %p119 = scmp.eq.s32.totalorder %s118, 0
    %s121 = sadd.s32 %s120, 1
    %s122 = scalar_select %p119, %s120, %s121
    %p125 = pneg %p119
    %p126 = scmp.eq.s32.totalorder %s10, 1
    %p127 = por %p125, %p126
    %p128 = scmp.ne.s32.totalorder %s120, %s123
    %p129 = scmp.eq.s32.totalorder %s10, 0
    %p130 = por %p128, %p129
    %p131 = scmp.ne.s32.totalorder %s120, %s123
    %p132 = scmp.eq.s32.totalorder %s15, 1
    %p133 = por %p131, %p132
    %p134 = scmp.ne.s32.totalorder %s123, %s124
    %p135 = scmp.eq.s32.totalorder %s15, 0
    %p136 = por %p134, %p135
    %p137 = scmp.ne.s32.totalorder %s123, %s124
    %p138 = scmp.eq.s32.totalorder %s16, 1
    %p139 = por %p137, %p138
    %p141 = scmp.ne.s32.totalorder %s124, %s140
    %p142 = scmp.eq.s32.totalorder %s16, 0
    %p143 = por %p141, %p142
    %p144 = scmp.le.s32.totalorder 1, %s10
    %p145 = scmp.lt.s32.totalorder %s10, 3
    %p146 = pnand %p144, %p145
    %p147 = pneg %p146
    // Predicated region
    $region9: #{ordinal_regression_layer.1} parent=5 // pred_check
      _
    $region10: #{ordinal_regression_layer.1} parent=5 // pred_check_branch
      %149 = sbr.rel (%p146) target = $region12
    $region11: #{ordinal_regression_layer.1} parent=5 // pred_region
      %s150 = ssub.s32 %s10, 1
    $region12: #{ordinal_regression_layer.1} parent=5 // pred_fallthru
      _
    %p151 = scmp.lt.s32.totalorder %s10, 2
    // Predicated region
    $region13: #{ordinal_regression_layer.1} parent=5 // pred_check
      %p152 = pneg %p151
    $region14: #{ordinal_regression_layer.1} parent=5 // pred_check_branch
      %154 = sbr.rel (%p152) target = $region16
    $region15: #{ordinal_regression_layer.1} parent=5 // pred_region
      // Predicated region
      $region17: #{ordinal_regression_layer.1} parent=15 // pred_check
        %p155 = pneg %p44
      $region18: #{ordinal_regression_layer.1} parent=15 // pred_check_branch
        %157 = sbr.rel (%p155) target = $region20
      $region19: #{ordinal_regression_layer.1} parent=15 // pred_region
        %s158 = smul.u32 2, %s18
        %p159 = scmp.lt.s32.totalorder %s17, 1
        %s160 = scalar_select %p159, %s17, 1
        %p161 = scmp.lt.s32.totalorder %s158, 3
        %s162 = scalar_select %p161, %s158, 3
        %s163 = smul.addr %s160, 4
        %s164 = sadd.s32 %s162, %s163
        %s165 = smul.addr %s164, 4
        %s166 = scalar_lea.vmem %s0, %s165
        %s167 = smul.u32 2, %s18
      $region20: #{ordinal_regression_layer.1} parent=15 // pred_fallthru
        _
      // Predicated region
      $region21: #{ordinal_regression_layer.1} parent=15 // pred_check
        %p168 = pneg %p74
      $region22: #{ordinal_regression_layer.1} parent=15 // pred_check_branch
        %170 = sbr.rel (%p168) target = $region24
      $region23: #{ordinal_regression_layer.1} parent=15 // pred_region
        %s171 = sadd.s32 %s18, 1
        %s172 = smul.u32 2, %s171
        %p173 = scmp.lt.s32.totalorder %s17, 1
        %s174 = scalar_select %p173, %s17, 1
        %p175 = scmp.lt.s32.totalorder %s172, 3
        %s176 = scalar_select %p175, %s172, 3
        %s177 = smul.addr %s174, 4
        %s178 = sadd.s32 %s176, %s177
        %s179 = smul.addr %s178, 4
        %s180 = scalar_lea.vmem %s1, %s179
        %s181 = sadd.s32 %s18, 1
        %s182 = smul.u32 2, %s181
      $region24: #{ordinal_regression_layer.1} parent=15 // pred_fallthru
        _
    $region16: #{ordinal_regression_layer.1} parent=5 // pred_fallthru
      _
    %p183 = scmp.le.s32.totalorder 1, %s10
    %p184 = scmp.lt.s32.totalorder %s10, 3
    %p185 = pnand %p183, %p184
    %p186 = pneg %p185
    // Predicated region
    $region25: #{ordinal_regression_layer.1} parent=5 // pred_check
      _
    $region26: #{ordinal_regression_layer.1} parent=5 // pred_check_branch
      %188 = sbr.rel (%p185) target = $region28
    $region27: #{ordinal_regression_layer.1} parent=5 // pred_region
      %s189 = ssub.s32 %s10, 1
      %s190 = smul.u32 2, %s20
      %p191 = scmp.lt.s32.totalorder %s19, 1
      %s192 = scalar_select %p191, %s19, 1
      %p193 = scmp.lt.s32.totalorder %s190, 3
      %s194 = scalar_select %p193, %s190, 3
      %s195 = smul.addr %s192, 4
      %s196 = sadd.s32 %s194, %s195
      %s197 = smul.addr %s196, 4
      %s198 = scalar_lea.vmem %s0, %s197
      %p199 = pneg %p50
      %p200 = pneg %p47
      %s201 = sadd.s32 %s20, 1
      %s202 = smul.u32 2, %s201
      %p203 = scmp.lt.s32.totalorder %s19, 1
      %s204 = scalar_select %p203, %s19, 1
      %p205 = scmp.lt.s32.totalorder %s202, 3
      %s206 = scalar_select %p205, %s202, 3
      %s207 = smul.addr %s204, 4
      %s208 = sadd.s32 %s206, %s207
      %s209 = smul.addr %s208, 4
      %s210 = scalar_lea.vmem %s1, %s209
      %p211 = pneg %p80
      %p212 = pneg %p77
      %p213 = pneg %p108
      %p214 = pneg %p105
      %s215 = smul.u32 2, %s20
      %p216 = scmp.lt.s32.totalorder %s19, 1
      %s217 = scalar_select %p216, %s19, 1
      %p218 = scmp.lt.s32.totalorder %s215, 1
      %s219 = scalar_select %p218, %s215, 1
      %s220 = smul.addr %s217, 2
      %s221 = sadd.s32 %s219, %s220
      %s222 = smul.addr %s221, 4
      %s223 = scalar_lea.vmem %s2, %s222
      %p224 = pneg %p136
      %p225 = pneg %p133
      %s226 = smul.u32 2, %s20
      %p227 = scmp.lt.s32.totalorder %s19, 1
      %s228 = scalar_select %p227, %s19, 1
      %p229 = scmp.lt.s32.totalorder %s226, 1
      %s230 = scalar_select %p229, %s226, 1
      %s231 = smul.addr %s228, 2
      %s232 = sadd.s32 %s230, %s231
      %s233 = scalar_lea.vmem %s3, %s232
      %s234 = smul.u32 2, %s20
      %p235 = scmp.lt.s32.totalorder %s19, 1
      %s236 = scalar_select %p235, %s19, 1
      %p237 = scmp.lt.s32.totalorder %s234, 3
      %s238 = scalar_select %p237, %s234, 3
      %s239 = smul.addr %s236, 4
      %s240 = sadd.s32 %s238, %s239
      %s241 = smul.addr %s240, 4
      %s242 = scalar_lea.vmem %s0, %s241
      %s243 = smul.u32 2, %s20
      %s244 = sadd.s32 %s20, 1
      %s245 = smul.u32 2, %s244
      %p246 = scmp.lt.s32.totalorder %s19, 1
      %s247 = scalar_select %p246, %s19, 1
      %p248 = scmp.lt.s32.totalorder %s245, 3
      %s249 = scalar_select %p248, %s245, 3
      %s250 = smul.addr %s247, 4
      %s251 = sadd.s32 %s249, %s250
      %s252 = smul.addr %s251, 4
      %s253 = scalar_lea.vmem %s1, %s252
      %s254 = sadd.s32 %s20, 1
      %s255 = smul.u32 2, %s254
      %s256 = smul.u32 2, %s20
      %p257 = scmp.lt.s32.totalorder %s19, 1
      %s258 = scalar_select %p257, %s19, 1
      %p259 = scmp.lt.s32.totalorder %s256, 1
      %s260 = scalar_select %p259, %s256, 1
      %s261 = smul.addr %s258, 2
      %s262 = sadd.s32 %s260, %s261
      %s263 = smul.addr %s262, 4
      %s264 = scalar_lea.vmem %s2, %s263
      %s265 = smul.u32 2, %s20
      %s266 = smul.u32 2, %s20
      %p267 = scmp.lt.s32.totalorder %s19, 1
      %s268 = scalar_select %p267, %s19, 1
      %p269 = scmp.lt.s32.totalorder %s266, 1
      %s270 = scalar_select %p269, %s266, 1
      %s271 = smul.addr %s268, 2
      %s272 = sadd.s32 %s270, %s271
      %s273 = scalar_lea.vmem %s3, %s272
      %s274 = smul.u32 2, %s20
      %v275 = vld [vmem:[%s242] sm:$0xff]
      %v276 = vld [vmem:[%s253] sm:$0xff]
      %v277 = vsub.f32 %v276, %v275
      %v278 = vxor.u32 %v277, 2147483648
      %v279 = vmul.f32 %v278, 1.442695
      %v280 = vpow.pop %v279
      %v281 = vadd.f32 %v280, 1.0
      %v282 = vrcp.pop %v281
      %v283 = vmul.f32 1.0, %v282
      %284 = vst [vmem:[%s264] sm:$0xff] %v283
      %vm285 = vcmp.ge.f32.partialorder %v277, 0.0
      %v286 = vsel %vm285, 1, 0
      %v287 = vcvt.s32.f32 %v286
      %v289 = vcombine.high %v287, %v287
      %vm291 = vcmask 1043456
      %v292 = vsel %vm291, %v287, 0.0
      %v293 = vrot.slane %v292, 4
      %v294 = vadd.f32 %v292, %v293
      %v295 = vrot.slane %v294, 2
      %v296 = vadd.f32 %v294, %v295
      %v297 = vrot.slane %v296, 1
      %v298 = vadd.f32 %v296, %v297
      %v299 = vsel %vm291, %v289, 0.0
      %v300 = vrot.slane %v299, 4
      %v301 = vadd.f32 %v299, %v300
      %v302 = vrot.slane %v301, 2
      %v303 = vadd.f32 %v301, %v302
      %v304 = vrot.slane %v303, 1
      %v305 = vadd.f32 %v303, %v304
      %v308 = vcombine.low %v298, %v305
      %v310 = vunpack.c.l.s4 1966171168
      %v311 = vunpack.c.0.s8 %v310
      %v312 = vlaneseq
      %v313 = vshrl.u32 %v312, 7
      %v314 = vsub.s32 %v311, %v313
      %v315 = vrot.slane %v308, %v314
      %v317 = vunpack.c.l.s4 1966171168
      %v318 = vunpack.c.0.s8 %v317
      %v319 = vlaneseq
      %v320 = vshrl.u32 %v319, 7
      %v321 = vsub.s32 %v318, %v320
      %v322 = vrot.slane %v315, %v321
      %v324 = vlaneseq
      %vm325 = vcmp.ge.s32.totalorder %v324, 0
      %vm326 = vcmp.lt.s32.totalorder %v324, 256
      %vm327 = vmand %vm325, %vm326
      %328 = vst.msk [vmem:[%s273] sm:$0x3] %vm327, %v322
      %s329 = smul.u32 2, %s20
      %p330 = scmp.lt.s32.totalorder %s19, 1
      %s331 = scalar_select %p330, %s19, 1
      %p332 = scmp.lt.s32.totalorder %s329, 1
      %s333 = scalar_select %p332, %s329, 1
      %s334 = smul.addr %s331, 2
      %s335 = sadd.s32 %s333, %s334
      %s336 = smul.addr %s335, 4
      %s337 = scalar_lea.vmem %s2, %s336
      %s338 = smul.u32 2, %s20
      %p339 = scmp.lt.s32.totalorder %s19, 1
      %s340 = scalar_select %p339, %s19, 1
      %p341 = scmp.lt.s32.totalorder %s338, 1
      %s342 = scalar_select %p341, %s338, 1
      %s343 = smul.addr %s340, 2
      %s344 = sadd.s32 %s342, %s343
      %s345 = scalar_lea.vmem %s3, %s344
      // Predicated region
      $region29: #{ordinal_regression_layer.1} parent=27 // pred_check
        %p346 = pneg %p105
      $region30: #{ordinal_regression_layer.1} parent=27 // pred_check_branch
        %348 = sbr.rel (%p346) target = $region32
      $region31: #{ordinal_regression_layer.1} parent=27 // pred_region
        %s349 = smul.u32 2, %s20
      $region32: #{ordinal_regression_layer.1} parent=27 // pred_fallthru
        _
      // Predicated region
      $region33: #{ordinal_regression_layer.1} parent=27 // pred_check
        %p350 = pneg %p133
      $region34: #{ordinal_regression_layer.1} parent=27 // pred_check_branch
        %352 = sbr.rel (%p350) target = $region36
      $region35: #{ordinal_regression_layer.1} parent=27 // pred_region
        %s353 = smul.u32 2, %s20
      $region36: #{ordinal_regression_layer.1} parent=27 // pred_fallthru
        _
    $region28: #{ordinal_regression_layer.1} parent=5 // pred_fallthru
      _
    %p354 = scmp.le.s32.totalorder 2, %s10
    // Predicated region
    $region37: #{ordinal_regression_layer.1} parent=5 // pred_check
      %p355 = pneg %p354
    $region38: #{ordinal_regression_layer.1} parent=5 // pred_check_branch
      %357 = sbr.rel (%p355) target = $region40
    $region39: #{ordinal_regression_layer.1} parent=5 // pred_region
      %s358 = ssub.s32 %s10, 2
      // Predicated region
      $region41: #{ordinal_regression_layer.1} parent=39 // pred_check
        %p359 = pneg %p111
      $region42: #{ordinal_regression_layer.1} parent=39 // pred_check_branch
        %361 = sbr.rel (%p359) target = $region44
      $region43: #{ordinal_regression_layer.1} parent=39 // pred_region
        %s362 = smul.u32 2, %s22
        %p363 = scmp.lt.s32.totalorder %s21, 1
        %s364 = scalar_select %p363, %s21, 1
        %p365 = scmp.lt.s32.totalorder %s362, 1
        %s366 = scalar_select %p365, %s362, 1
        %s367 = smul.addr %s364, 2
        %s368 = sadd.s32 %s366, %s367
        %s369 = smul.addr %s368, 4
        %s370 = scalar_lea.vmem %s2, %s369
      $region44: #{ordinal_regression_layer.1} parent=39 // pred_fallthru
        _
      // Predicated region
      $region45: #{ordinal_regression_layer.1} parent=39 // pred_check
        %p371 = pneg %p139
      $region46: #{ordinal_regression_layer.1} parent=39 // pred_check_branch
        %373 = sbr.rel (%p371) target = $region48
      $region47: #{ordinal_regression_layer.1} parent=39 // pred_region
        %s374 = smul.u32 2, %s22
        %p375 = scmp.lt.s32.totalorder %s21, 1
        %s376 = scalar_select %p375, %s21, 1
        %p377 = scmp.lt.s32.totalorder %s374, 1
        %s378 = scalar_select %p377, %s374, 1
        %s379 = smul.addr %s376, 2
        %s380 = sadd.s32 %s378, %s379
        %s381 = scalar_lea.vmem %s3, %s380
      $region48: #{ordinal_regression_layer.1} parent=39 // pred_fallthru
        _
    $region40: #{ordinal_regression_layer.1} parent=5 // pred_fallthru
      _
  $region6: #{ordinal_regression_layer.1} parent=0 // loop_footer
    %s14 = sadd.s32 1, %s10
  $region7: #{ordinal_regression_layer.1} parent=0 // loop_footer_branch
    %9 = sbr.rel target = $region3
  $region8: #{ordinal_regression_layer.1} parent=0 // loop_exit
    _

</llo_original>
